<compile_context>
chip_gen: v6e
topology: v6e:2x2x1
jax: 0.10.0
libtpu: 0.0.40
codegen_flags: <defaults>
</compile_context>

<pallas_src>
import functools

import jax
import jax.numpy as jnp
from jax.experimental import pallas as pl
from jax.experimental.pallas import tpu as pltpu


# ----------------------------------------------------------------------------
# Stateless counter-based U[0,1) hash (int32 only -> lowers on TPU and CPU).
# ----------------------------------------------------------------------------
def _i32c(c):
    """Python int -> value representable as int32 (two's complement wrap)."""
    c &= 0xFFFFFFFF
    return c - (1 << 32) if c >= (1 << 31) else c


_C_ROW = _i32c(0x9E3779B1)
_C_COL = _i32c(0x85EBCA77)
_C_M1 = _i32c(0x7FEB352D)
_C_M2 = _i32c(0x846CA68B)
_BIAS_SALT = _i32c(0x5BD1E995)


def _lsr(x, s):
    """Logical right shift of int32 (arithmetic shift + mask of the top bits)."""
    mask = (1 << (32 - s)) - 1
    return (x >> s) & mask


def _hash_to_unit(x):
    """murmur3-style 32-bit finalizer -> U[0,1) with 24-bit resolution."""
    x = x ^ _lsr(x, 16)
    x = x * jnp.int32(_C_M1)
    x = x ^ _lsr(x, 15)
    x = x * jnp.int32(_C_M2)
    x = x ^ _lsr(x, 16)
    mant = _lsr(x, 8)                                   # in [0, 2**24)
    return mant.astype(jnp.float32) * jnp.float32(1.0 / 16777216.0)


def _uniform_weight(seed_i32, row_idx, col_idx):
    x = seed_i32 + row_idx * jnp.int32(_C_ROW) + col_idx * jnp.int32(_C_COL)
    return _hash_to_unit(x)


def _uniform_bias(seed_i32, idx):
    x = (seed_i32 ^ jnp.int32(_BIAS_SALT)) + idx * jnp.int32(_C_ROW)
    return _hash_to_unit(x)


# ----------------------------------------------------------------------------
# Tiling helpers.
# ----------------------------------------------------------------------------
def _round_up(x, m):
    return (x + m - 1) // m * m


def _pick_tile(padded, candidates):
    for t in candidates:
        if padded % t == 0:
            return t
    return candidates[-1]


def _param_tiling(out_features, in_features):
    n_pad = _round_up(out_features, 128)     # lane-dense output / MXU N dim
    k_pad = _round_up(in_features, 128)      # lane-dense contraction dim
    tn = _pick_tile(n_pad, (512, 256, 128))  # big tiles: fewer grid steps
    tk = _pick_tile(k_pad, (1024, 512, 256, 128))
    return n_pad, k_pad, tn, tk


def _batch_tiling(batch):
    b_pad = _round_up(batch, 8)
    if b_pad <= 256:
        return b_pad, b_pad
    for tb in (256, 128, 64, 32, 16, 8):
        if b_pad % tb == 0:
            return b_pad, tb
    return b_pad, 8  # unreachable (b_pad is a multiple of 8)


def _vmem_limit_bytes():
    """Generation-aware scoped-VMEM budget (v7x: 64 MiB phys; v5e/v6e: 128)."""
    try:
        phys = int(pltpu.get_tpu_info().vmem_capacity_bytes)
    except Exception:
        phys = 64 * 1024 * 1024
    return max(32 * 1024 * 1024, min(phys // 2, 96 * 1024 * 1024))


# ----------------------------------------------------------------------------
# Kernel.
# ----------------------------------------------------------------------------
def _noisy_linear_kernel(seed_ref, x_ref, wm_ref, ws_ref, bm_ref, bs_ref,
                         o_ref, *, use_bf16_mxu):
    n = pl.program_id(1)
    k = pl.program_id(2)
    nk = pl.num_programs(2)
    tn, tk = wm_ref.shape

    @pl.when(k == 0)
    def _init():
        o_ref[...] = jnp.zeros_like(o_ref)

    seed = seed_ref[0]

    # On-chip, tiling-independent weight noise for this (tn, tk) tile.
    rows = jax.lax.broadcasted_iota(jnp.int32, (tn, tk), 0) + n * tn
    cols = jax.lax.broadcasted_iota(jnp.int32, (tn, tk), 1) + k * tk
    eps_w = _uniform_weight(seed, rows, cols)
    w = wm_ref[...] + ws_ref[...] * eps_w                # f32 noise fusion (VPU)

    x = x_ref[...]                                       # (tb, tk)
    if use_bf16_mxu:                                     # static flag
        x = x.astype(jnp.bfloat16)
        w = w.astype(jnp.bfloat16)

    # Contract last dim of both operands: feeds the MXU without transposing w,
    # accumulating directly into the resident f32 output block.
    o_ref[...] += jax.lax.dot_general(
        x, w, dimension_numbers=(((1,), (1,)), ((), ())),
        preferred_element_type=jnp.float32)              # (tb, tn)

    @pl.when(k == nk - 1)
    def _finalize():
        j = jax.lax.broadcasted_iota(jnp.int32, (1, tn), 1) + n * tn
        eps_b = _uniform_bias(seed, j)                   # (1, tn), no slicing
        o_ref[...] += bm_ref[...] + bs_ref[...] * eps_b


# ----------------------------------------------------------------------------
# Wrappers.
# ----------------------------------------------------------------------------
def prepare_noisy_linear_params(weight_mean, weight_std, bias_mean, bias_std):
    """Pad the parameters ONCE (lane/sublane aligned) so the forward pass never
    re-materializes weight-shaped copies."""
    out_features, in_features = weight_mean.shape
    n_pad, k_pad, tn, tk = _param_tiling(out_features, in_features)
    f32 = jnp.float32
    wm = jnp.zeros((n_pad, k_pad), f32).at[:out_features, :in_features].set(
        weight_mean.astype(f32))
    ws = jnp.zeros((n_pad, k_pad), f32).at[:out_features, :in_features].set(
        weight_std.astype(f32))
    bm = jnp.zeros((1, n_pad), f32).at[0, :out_features].set(bias_mean.astype(f32))
    bs = jnp.zeros((1, n_pad), f32).at[0, :out_features].set(bias_std.astype(f32))
    return dict(wm=wm, ws=ws, bm=bm, bs=bs,
                out_features=out_features, in_features=in_features,
                n_pad=n_pad, k_pad=k_pad, tn=tn, tk=tk)


def noisy_linear(params, x, seed, *, use_bf16_mxu=False):
    """Forward pass of the noisy Linear module (fresh noise per `seed`)."""
    out_features = params["out_features"]
    in_features = params["in_features"]
    n_pad, k_pad, tn, tk = params["n_pad"], params["k_pad"], params["tn"], params["tk"]
    batch = x.shape[0]
    b_pad, tb = _batch_tiling(batch)

    # x is small relative to the weights; pad per call only if needed.
    xp = x.astype(jnp.float32)
    if (batch, in_features) != (b_pad, k_pad):
        xp = jnp.zeros((b_pad, k_pad), jnp.float32).at[:batch, :in_features].set(xp)

    seed_arr = jnp.asarray(seed, jnp.int32).reshape((1,))
    grid = (b_pad // tb, n_pad // tn, k_pad // tk)

    # bf16 MXU path only pays off with a real batch tile (review item).
    use_bf16 = bool(use_bf16_mxu) and tb >= 128

    grid_spec = pltpu.PrefetchScalarGridSpec(
        num_scalar_prefetch=1,
        grid=grid,
        in_specs=[
            pl.BlockSpec((tb, tk), lambda b, n, k, s: (b, k)),   # x
            pl.BlockSpec((tn, tk), lambda b, n, k, s: (n, k)),   # weight_mean
            pl.BlockSpec((tn, tk), lambda b, n, k, s: (n, k)),   # weight_std
            pl.BlockSpec((1, tn),  lambda b, n, k, s: (0, n)),   # bias_mean
            pl.BlockSpec((1, tn),  lambda b, n, k, s: (0, n)),   # bias_std
        ],
        out_specs=pl.BlockSpec((tb, tn), lambda b, n, k, s: (b, n)),
    )

    y_pad = pl.pallas_call(
        functools.partial(_noisy_linear_kernel, use_bf16_mxu=use_bf16),
        out_shape=jax.ShapeDtypeStruct((b_pad, n_pad), jnp.float32),
        grid_spec=grid_spec,
        compiler_params=pltpu.CompilerParams(
            dimension_semantics=("parallel", "parallel", "arbitrary"),
            vmem_limit_bytes=_vmem_limit_bytes(),
        ),
    )(seed_arr, xp, params["wm"], params["ws"], params["bm"], params["bs"])

    return y_pad[:batch, :out_features]


def sample_noise(out_features, in_features, seed):
    """Plain-JAX replay of the exact eps values drawn inside the kernel.
    The hash depends only on (seed, row, col), so no replay kernel is needed."""
    seed_i32 = jnp.int32(seed)
    rows = jnp.arange(out_features, dtype=jnp.int32)[:, None]
    cols = jnp.arange(in_features, dtype=jnp.int32)[None, :]
    eps_w = _uniform_weight(seed_i32, rows, cols)
    eps_b = _uniform_bias(seed_i32, jnp.arange(out_features, dtype=jnp.int32))
    return eps_w, eps_b


# ----------------------------------------------------------------------------
# Demo / self-check.
# ----------------------------------------------------------------------------
if __name__ == "__main__":
    in_features = 32
    out_features = 64
    batch = 8
    noise_seed = 42

    key = jax.random.PRNGKey(0)
    k_x, k_wm, k_ws, k_bm, k_bs = jax.random.split(key, 5)

    # Parameter init matching uniform_(-0.1, 0.1) in the torch module.
    weight_mean = jax.random.uniform(k_wm, (out_features, in_features),
                                     minval=-0.1, maxval=0.1, dtype=jnp.float32)
    weight_std = jax.random.uniform(k_ws, (out_features, in_features),
                                    minval=-0.1, maxval=0.1, dtype=jnp.float32)
    bias_mean = jax.random.uniform(k_bm, (out_features,),
                                   minval=-0.1, maxval=0.1, dtype=jnp.float32)
    bias_std = jax.random.uniform(k_bs, (out_features,),
                                  minval=-0.1, maxval=0.1, dtype=jnp.float32)
    x = jax.random.normal(k_x, (batch, in_features), dtype=jnp.float32)

    params = prepare_noisy_linear_params(weight_mean, weight_std,
                                         bias_mean, bias_std)
    y = noisy_linear(params, x, noise_seed)
    jax.block_until_ready(y)

    # Reference: replay the same noise in plain JAX, then a high-precision linear.
    eps_w, eps_b = sample_noise(out_features, in_features, noise_seed)
    w_ref = weight_mean + weight_std * eps_w
    b_ref = bias_mean + bias_std * eps_b
    y_ref = jnp.dot(x, w_ref.T, precision=jax.lax.Precision.HIGHEST) + b_ref

    assert y.shape == (batch, out_features), "bad output shape"
    assert bool(jnp.all(jnp.isfinite(y))), "non-finite output"
    assert bool(jnp.all((eps_w >= 0.0) & (eps_w < 1.0))), "eps_w outside [0,1)"
    assert bool(jnp.all((eps_b >= 0.0) & (eps_b < 1.0))), "eps_b outside [0,1)"

    # Tolerance covers any MXU internal precision mode while still catching
    # structural bugs (wrong eps / missing bias give errors >> tol).
    err = float(jnp.max(jnp.abs(y - y_ref)))
    tol = float(1e-4 + (2.0 ** -7) * jnp.max(jnp.abs(x) @ jnp.abs(w_ref).T))
    assert err <= tol, f"mismatch vs reference: err={err} tol={tol}"

    print("KERNEL_OK")
</pallas_src>

<mosaic_0001>
module attributes {stable_mosaic.version = 11 : i64} {
  func.func @_noisy_linear_kernel(%arg0: i32, %arg1: i32, %arg2: i32, %arg3: memref<1xi32, #tpu.memory_space<smem>>, %arg4: memref<8x128xf32, #tpu.memory_space<vmem>>, %arg5: memref<128x128xf32, #tpu.memory_space<vmem>>, %arg6: memref<128x128xf32, #tpu.memory_space<vmem>>, %arg7: memref<1x128xf32, #tpu.memory_space<vmem>>, %arg8: memref<1x128xf32, #tpu.memory_space<vmem>>, %arg9: memref<8x128xf32, #tpu.memory_space<vmem>>) attributes {dimension_semantics = [#tpu.dimension_semantics<parallel>, #tpu.dimension_semantics<parallel>, #tpu.dimension_semantics<arbitrary>], iteration_bounds = array<i64: 1, 1, 1>, scalar_prefetch = 1 : i64, scratch_operands = 0 : i64, tpu.core_type = #tpu.core_type<tc>, window_params = [{transform_indices = @transform_0, window_bounds = array<i64: 8, 128>}, {transform_indices = @transform_1, window_bounds = array<i64: 128, 128>}, {transform_indices = @transform_2, window_bounds = array<i64: 128, 128>}, {transform_indices = @transform_3, window_bounds = array<i64: 1, 128>}, {transform_indices = @transform_4, window_bounds = array<i64: 1, 128>}, {transform_indices = @transform_5, window_bounds = array<i64: 8, 128>}]} {
    %c0_i32 = arith.constant 0 : i32
    %0 = arith.cmpi eq, %arg2, %c0_i32 : i32
    %1 = arith.extui %0 : i1 to i32
    %c0_i32_0 = arith.constant 0 : i32
    %2 = arith.cmpi ne, %1, %c0_i32_0 : i32
    scf.if %2 {
      %cst_17 = arith.constant 0.000000e+00 : f32
      %57 = vector.broadcast %cst_17 : f32 to vector<8x128xf32>
      %c0_18 = arith.constant 0 : index
      %c0_19 = arith.constant 0 : index
      %58 = vector.load %arg9[%c0_18, %c0_19] : memref<8x128xf32, #tpu.memory_space<vmem>>, vector<8x128xf32>
      tpu.vector_store %arg9[%c0_18, %c0_19], %57 {strides = array<i32>} : memref<8x128xf32, #tpu.memory_space<vmem>>, vector<8x128xf32>,
    } else {
    }
    %c0 = arith.constant 0 : index
    %3 = memref.load %arg3[%c0] : memref<1xi32, #tpu.memory_space<smem>>
    %4 = tpu.iota {dimensions = array<i32: 0>} : vector<128x128xi32>
    %c128_i32 = arith.constant 128 : i32
    %5 = arith.muli %arg1, %c128_i32 : i32
    %6 = vector.broadcast %5 : i32 to vector<128x128xi32>
    %7 = arith.addi %4, %6 : vector<128x128xi32>
    %8 = tpu.iota {dimensions = array<i32: 1>} : vector<128x128xi32>
    %c128_i32_1 = arith.constant 128 : i32
    %9 = arith.muli %arg2, %c128_i32_1 : i32
    %10 = vector.broadcast %9 : i32 to vector<128x128xi32>
    %11 = arith.addi %8, %10 : vector<128x128xi32>
    %c-1640531535_i32 = arith.constant -1640531535 : i32
    %12 = vector.broadcast %c-1640531535_i32 : i32 to vector<128x128xi32>
    %13 = arith.muli %7, %12 : vector<128x128xi32>
    %14 = vector.broadcast %3 : i32 to vector<128x128xi32>
    %15 = arith.addi %14, %13 : vector<128x128xi32>
    %c-2048144777_i32 = arith.constant -2048144777 : i32
    %16 = vector.broadcast %c-2048144777_i32 : i32 to vector<128x128xi32>
    %17 = arith.muli %11, %16 : vector<128x128xi32>
    %18 = arith.addi %15, %17 : vector<128x128xi32>
    %c16_i32 = arith.constant 16 : i32
    %19 = vector.broadcast %c16_i32 : i32 to vector<128x128xi32>
    %20 = arith.shrsi %18, %19 : vector<128x128xi32>
    %c65535_i32 = arith.constant 65535 : i32
    %21 = vector.broadcast %c65535_i32 : i32 to vector<128x128xi32>
    %22 = arith.andi %20, %21 : vector<128x128xi32>
    %23 = arith.xori %18, %22 : vector<128x128xi32>
    %c2146121005_i32 = arith.constant 2146121005 : i32
    %24 = vector.broadcast %c2146121005_i32 : i32 to vector<128x128xi32>
    %25 = arith.muli %23, %24 : vector<128x128xi32>
    %c15_i32 = arith.constant 15 : i32
    %26 = vector.broadcast %c15_i32 : i32 to vector<128x128xi32>
    %27 = arith.shrsi %25, %26 : vector<128x128xi32>
    %c131071_i32 = arith.constant 131071 : i32
    %28 = vector.broadcast %c131071_i32 : i32 to vector<128x128xi32>
    %29 = arith.andi %27, %28 : vector<128x128xi32>
    %30 = arith.xori %25, %29 : vector<128x128xi32>
    %c-2073254261_i32 = arith.constant -2073254261 : i32
    %31 = vector.broadcast %c-2073254261_i32 : i32 to vector<128x128xi32>
    %32 = arith.muli %30, %31 : vector<128x128xi32>
    %c16_i32_2 = arith.constant 16 : i32
    %33 = vector.broadcast %c16_i32_2 : i32 to vector<128x128xi32>
    %34 = arith.shrsi %32, %33 : vector<128x128xi32>
    %c65535_i32_3 = arith.constant 65535 : i32
    %35 = vector.broadcast %c65535_i32_3 : i32 to vector<128x128xi32>
    %36 = arith.andi %34, %35 : vector<128x128xi32>
    %37 = arith.xori %32, %36 : vector<128x128xi32>
    %c8_i32 = arith.constant 8 : i32
    %38 = vector.broadcast %c8_i32 : i32 to vector<128x128xi32>
    %39 = arith.shrsi %37, %38 : vector<128x128xi32>
    %c16777215_i32 = arith.constant 16777215 : i32
    %40 = vector.broadcast %c16777215_i32 : i32 to vector<128x128xi32>
    %41 = arith.andi %39, %40 : vector<128x128xi32>
    %42 = arith.sitofp %41 : vector<128x128xi32> to vector<128x128xf32>
    %cst = arith.constant 5.96046448E-8 : f32
    %43 = vector.broadcast %cst : f32 to vector<128x128xf32>
    %44 = arith.mulf %42, %43 : vector<128x128xf32>
    %c0_4 = arith.constant 0 : index
    %c0_5 = arith.constant 0 : index
    %45 = vector.load %arg5[%c0_4, %c0_5] : memref<128x128xf32, #tpu.memory_space<vmem>>, vector<128x128xf32>
    %c0_6 = arith.constant 0 : index
    %c0_7 = arith.constant 0 : index
    %46 = vector.load %arg6[%c0_6, %c0_7] : memref<128x128xf32, #tpu.memory_space<vmem>>, vector<128x128xf32>
    %47 = arith.mulf %46, %44 : vector<128x128xf32>
    %48 = arith.addf %45, %47 : vector<128x128xf32>
    %c0_8 = arith.constant 0 : index
    %c0_9 = arith.constant 0 : index
    %49 = vector.load %arg4[%c0_8, %c0_9] : memref<8x128xf32, #tpu.memory_space<vmem>>, vector<8x128xf32>
    %c0_10 = arith.constant 0 : index
    %c0_11 = arith.constant 0 : index
    %50 = vector.load %arg9[%c0_10, %c0_11] : memref<8x128xf32, #tpu.memory_space<vmem>>, vector<8x128xf32>
    %cst_12 = arith.constant dense<0.000000e+00> : vector<8x128xf32>
    %51 = tpu.matmul %49, %48, %cst_12 {dimension_numbers = #tpu.dot_dimension_numbers<[1], [1], [0], [0], [0, 0, 1, 0], [], []>} : vector<8x128xf32>, vector<128x128xf32>, vector<8x128xf32> -> vector<8x128xf32>
    %52 = arith.addf %50, %51 : vector<8x128xf32>
    %c0_13 = arith.constant 0 : index
    %c0_14 = arith.constant 0 : index
    %53 = vector.load %arg9[%c0_13, %c0_14] : memref<8x128xf32, #tpu.memory_space<vmem>>, vector<8x128xf32>
    tpu.vector_store %arg9[%c0_13, %c0_14], %52 {strides = array<i32>} : memref<8x128xf32, #tpu.memory_space<vmem>>, vector<8x128xf32>,
    %c0_i32_15 = arith.constant 0 : i32
    %54 = arith.cmpi eq, %arg2, %c0_i32_15 : i32
    %55 = arith.extui %54 : i1 to i32
    %c0_i32_16 = arith.constant 0 : i32
    %56 = arith.cmpi ne, %55, %c0_i32_16 : i32
    scf.if %56 {
      %57 = tpu.iota {dimensions = array<i32: 1>} : vector<1x128xi32>
      %c128_i32_17 = arith.constant 128 : i32
      %58 = arith.muli %arg1, %c128_i32_17 : i32
      %59 = vector.broadcast %58 : i32 to vector<1x128xi32>
      %60 = arith.addi %57, %59 : vector<1x128xi32>
      %c1540483477_i32 = arith.constant 1540483477 : i32
      %61 = arith.xori %3, %c1540483477_i32 : i32
      %c-1640531535_i32_18 = arith.constant -1640531535 : i32
      %62 = vector.broadcast %c-1640531535_i32_18 : i32 to vector<1x128xi32>
      %63 = arith.muli %60, %62 : vector<1x128xi32>
      %64 = vector.broadcast %61 : i32 to vector<1x128xi32>
      %65 = arith.addi %64, %63 : vector<1x128xi32>
      %c16_i32_19 = arith.constant 16 : i32
      %66 = vector.broadcast %c16_i32_19 : i32 to vector<1x128xi32>
      %67 = arith.shrsi %65, %66 : vector<1x128xi32>
      %c65535_i32_20 = arith.constant 65535 : i32
      %68 = vector.broadcast %c65535_i32_20 : i32 to vector<1x128xi32>
      %69 = arith.andi %67, %68 : vector<1x128xi32>
      %70 = arith.xori %65, %69 : vector<1x128xi32>
      %c2146121005_i32_21 = arith.constant 2146121005 : i32
      %71 = vector.broadcast %c2146121005_i32_21 : i32 to vector<1x128xi32>
      %72 = arith.muli %70, %71 : vector<1x128xi32>
      %c15_i32_22 = arith.constant 15 : i32
      %73 = vector.broadcast %c15_i32_22 : i32 to vector<1x128xi32>
      %74 = arith.shrsi %72, %73 : vector<1x128xi32>
      %c131071_i32_23 = arith.constant 131071 : i32
      %75 = vector.broadcast %c131071_i32_23 : i32 to vector<1x128xi32>
      %76 = arith.andi %74, %75 : vector<1x128xi32>
      %77 = arith.xori %72, %76 : vector<1x128xi32>
      %c-2073254261_i32_24 = arith.constant -2073254261 : i32
      %78 = vector.broadcast %c-2073254261_i32_24 : i32 to vector<1x128xi32>
      %79 = arith.muli %77, %78 : vector<1x128xi32>
      %c16_i32_25 = arith.constant 16 : i32
      %80 = vector.broadcast %c16_i32_25 : i32 to vector<1x128xi32>
      %81 = arith.shrsi %79, %80 : vector<1x128xi32>
      %c65535_i32_26 = arith.constant 65535 : i32
      %82 = vector.broadcast %c65535_i32_26 : i32 to vector<1x128xi32>
      %83 = arith.andi %81, %82 : vector<1x128xi32>
      %84 = arith.xori %79, %83 : vector<1x128xi32>
      %c8_i32_27 = arith.constant 8 : i32
      %85 = vector.broadcast %c8_i32_27 : i32 to vector<1x128xi32>
      %86 = arith.shrsi %84, %85 : vector<1x128xi32>
      %c16777215_i32_28 = arith.constant 16777215 : i32
      %87 = vector.broadcast %c16777215_i32_28 : i32 to vector<1x128xi32>
      %88 = arith.andi %86, %87 : vector<1x128xi32>
      %89 = arith.sitofp %88 : vector<1x128xi32> to vector<1x128xf32>
      %cst_29 = arith.constant 5.96046448E-8 : f32
      %90 = vector.broadcast %cst_29 : f32 to vector<1x128xf32>
      %91 = arith.mulf %89, %90 : vector<1x128xf32>
      %c0_30 = arith.constant 0 : index
      %c0_31 = arith.constant 0 : index
      %92 = vector.load %arg9[%c0_30, %c0_31] : memref<8x128xf32, #tpu.memory_space<vmem>>, vector<8x128xf32>
      %c0_32 = arith.constant 0 : index
      %c0_33 = arith.constant 0 : index
      %93 = vector.load %arg7[%c0_32, %c0_33] : memref<1x128xf32, #tpu.memory_space<vmem>>, vector<1x128xf32>
      %c0_34 = arith.constant 0 : index
      %c0_35 = arith.constant 0 : index
      %94 = vector.load %arg8[%c0_34, %c0_35] : memref<1x128xf32, #tpu.memory_space<vmem>>, vector<1x128xf32>
      %95 = arith.mulf %94, %91 : vector<1x128xf32>
      %96 = arith.addf %93, %95 : vector<1x128xf32>
      %97 = vector.broadcast %96 : vector<1x128xf32> to vector<8x128xf32>
      %98 = arith.addf %92, %97 : vector<8x128xf32>
      %c0_36 = arith.constant 0 : index
      %c0_37 = arith.constant 0 : index
      %99 = vector.load %arg9[%c0_36, %c0_37] : memref<8x128xf32, #tpu.memory_space<vmem>>, vector<8x128xf32>
      tpu.vector_store %arg9[%c0_36, %c0_37], %98 {strides = array<i32>} : memref<8x128xf32, #tpu.memory_space<vmem>>, vector<8x128xf32>,
    } else {
    }
    return
  }
  func.func @transform_0(%arg0: i32, %arg1: i32, %arg2: i32, %arg3: memref<1xi32, #tpu.memory_space<smem>>) -> (i32, i32) {
    %c0_i32 = arith.constant 0 : i32
    return %arg0, %arg2 : i32, i32
  }
  func.func @transform_1(%arg0: i32, %arg1: i32, %arg2: i32, %arg3: memref<1xi32, #tpu.memory_space<smem>>) -> (i32, i32) {
    %c0_i32 = arith.constant 0 : i32
    return %arg1, %arg2 : i32, i32
  }
  func.func @transform_2(%arg0: i32, %arg1: i32, %arg2: i32, %arg3: memref<1xi32, #tpu.memory_space<smem>>) -> (i32, i32) {
    %c0_i32 = arith.constant 0 : i32
    return %arg1, %arg2 : i32, i32
  }
  func.func @transform_3(%arg0: i32, %arg1: i32, %arg2: i32, %arg3: memref<1xi32, #tpu.memory_space<smem>>) -> (i32, i32) {
    %c0_i32 = arith.constant 0 : i32
    %c0_i32_0 = arith.constant 0 : i32
    return %c0_i32, %arg1 : i32, i32
  }
  func.func @transform_4(%arg0: i32, %arg1: i32, %arg2: i32, %arg3: memref<1xi32, #tpu.memory_space<smem>>) -> (i32, i32) {
    %c0_i32 = arith.constant 0 : i32
    %c0_i32_0 = arith.constant 0 : i32
    return %c0_i32, %arg1 : i32, i32
  }
  func.func @transform_5(%arg0: i32, %arg1: i32, %arg2: i32, %arg3: memref<1xi32, #tpu.memory_space<smem>>) -> (i32, i32) {
    %c0_i32 = arith.constant 0 : i32
    return %arg0, %arg1 : i32, i32
  }
}

</mosaic_0001>

<llo_original>
// kernel: tpu_custom_call.1
$region0: #{tpu_custom_call.1}
  #allocation0 [shape = 'u32[]', space=smem, size = 0x4, offset = 0x4, fixed_abs, tag = 'smem constant byte address 0x4 - core index']
  #allocation1 [shape = 'u32[144,128]{1,0:T(1,128)}', space=vmem, size = 0x12000, scoped, tag = 'internal scratch']
  #allocation2 [shape = 's32[1]{0}', space=sflag, size = 0x4, scoped, tag = 'scoped memory for tpu_custom_call.1']
  #allocation3 [shape = 's32[1]{0:T(128)S(6)}', space=smem, size = 0x200, scoped, tag = 'prefetched SMEM operand 0']
  %s0 = inlined_call_operand.<no memory space> [shape: s32[1], index: 0, kind: input, shape index: {}]
  %s1 = inlined_call_operand.hbm [shape: f32[8,128], index: 1, kind: input, shape index: {}]
  %s2 = inlined_call_operand.hbm [shape: f32[128,128], index: 2, kind: input, shape index: {}]
  %s3 = inlined_call_operand.hbm [shape: f32[128,128], index: 3, kind: input, shape index: {}]
  %s4 = inlined_call_operand.vmem [shape: f32[1,128], index: 4, kind: input, shape index: {}]
  %s5 = inlined_call_operand.vmem [shape: f32[1,128], index: 5, kind: input, shape index: {}]
  %s6 = inlined_call_operand.hbm [shape: f32[8,128], index: 6, kind: output, shape index: {}]
  %s7 = sld [smem:[#allocation0]]
  $region50: #{tpu_custom_call.1} parent=0
    _
  %s9 = ssub.s32 1, %s7
  %s10 = scalar_select 0, %s9, %s7
  %11 = sst [smem:[#allocation3]] %s0
  $region1: #{tpu_custom_call.1} parent=0
    #allocation4 [shape = 'u8[4096]{0}', space=vmem, size = 0x1000, scoped, tag = 'input window, operand 1, single buffered']
    #allocation5 [shape = 's32[1]{0}', space=sflag, size = 0x4, scoped, tag = 'scoped memory for tpu_custom_call.1']
    #allocation6 [shape = 's32[1]{0}', space=sflag, size = 0x4, scoped, tag = 'scoped memory for tpu_custom_call.1']
    #allocation7 [shape = 'u8[65536]{0}', space=vmem, size = 0x10000, scoped, tag = 'input window, operand 2, single buffered']
    #allocation8 [shape = 's32[1]{0}', space=sflag, size = 0x4, scoped, tag = 'scoped memory for tpu_custom_call.1']
    #allocation9 [shape = 'u8[65536]{0}', space=vmem, size = 0x10000, scoped, tag = 'input window, operand 3, single buffered']
    #allocation10 [shape = 'u8[4096]{0}', space=vmem, size = 0x1000, scoped, tag = 'output window, operand 0, single buffered']
    %12 = vsyncpa [#allocation5], 0
    %13 = vsyncpa [#allocation8], 0
    %14 = vsyncpa [#allocation6], 0
    // Predicated region
    $region2: #{tpu_custom_call.1} parent=1 // pred_check
      _
    $region3: #{tpu_custom_call.1} parent=1 // pred_check_branch
      %16 = sbr.rel (0) target = $region5
    $region4: #{tpu_custom_call.1} parent=1 // pred_region
      %s18 = ssub.s32 128, 128
      %19 = vsyncadd [#allocation5], %s18
      %s21 = sshll.u32 [#allocation4], 4
      %s22 = int_to_ptr.vmem [resolvable:$true] %s21
      %24 = dma.hbm_to_vmem [thread:$0]  %s1, 128, %s22, [#allocation5]
    $region5: #{tpu_custom_call.1} parent=1 // pred_fallthru
      _
    // Predicated region
    $region6: #{tpu_custom_call.1} parent=1 // pred_check
      _
    $region7: #{tpu_custom_call.1} parent=1 // pred_check_branch
      %26 = sbr.rel (0) target = $region9
    $region8: #{tpu_custom_call.1} parent=1 // pred_region
      %s28 = ssub.s32 2048, 2048
      %29 = vsyncadd [#allocation8], %s28
      %s30 = sshll.u32 [#allocation7], 4
      %s31 = int_to_ptr.vmem [resolvable:$true] %s30
      %36 = dma.hbm_to_vmem [thread:$0]  %s2, 2048, %s31, [#allocation8], 128, 128, 8
    $region9: #{tpu_custom_call.1} parent=1 // pred_fallthru
      _
    // Predicated region
    $region10: #{tpu_custom_call.1} parent=1 // pred_check
      _
    $region11: #{tpu_custom_call.1} parent=1 // pred_check_branch
      %38 = sbr.rel (0) target = $region13
    $region12: #{tpu_custom_call.1} parent=1 // pred_region
      %s40 = ssub.s32 2048, 2048
      %41 = vsyncadd [#allocation8], %s40
      %s42 = sshll.u32 [#allocation9], 4
      %s43 = int_to_ptr.vmem [resolvable:$true] %s42
      %48 = dma.hbm_to_vmem [thread:$0]  %s3, 2048, %s43, [#allocation8], 128, 128, 8
    $region13: #{tpu_custom_call.1} parent=1 // pred_fallthru
      _
    // Predicated region
    $region14: #{tpu_custom_call.1} parent=1 // pred_check
      _
    $region15: #{tpu_custom_call.1} parent=1 // pred_check_branch
      %50 = sbr.rel (0) target = $region17
    $region16: #{tpu_custom_call.1} parent=1 // pred_region
      _
    $region17: #{tpu_custom_call.1} parent=1 // pred_fallthru
      _
    // Predicated region
    $region18: #{tpu_custom_call.1} parent=1 // pred_check
      _
    $region19: #{tpu_custom_call.1} parent=1 // pred_check_branch
      %52 = sbr.rel (0) target = $region21
    $region20: #{tpu_custom_call.1} parent=1 // pred_region
      _
    $region21: #{tpu_custom_call.1} parent=1 // pred_fallthru
      _
    // Predicated region
    $region22: #{tpu_custom_call.1} parent=1 // pred_check
      _
    $region23: #{tpu_custom_call.1} parent=1 // pred_check_branch
      %54 = sbr.rel (0) target = $region25
    $region24: #{tpu_custom_call.1} parent=1 // pred_region
      %55 = dma.done [#allocation5], 128
    $region25: #{tpu_custom_call.1} parent=1 // pred_fallthru
      _
    // Predicated region
    $region26: #{tpu_custom_call.1} parent=1 // pred_check
      _
    $region27: #{tpu_custom_call.1} parent=1 // pred_check_branch
      %57 = sbr.rel (0) target = $region29
    $region28: #{tpu_custom_call.1} parent=1 // pred_region
      %58 = dma.done [#allocation8], 2048
    $region29: #{tpu_custom_call.1} parent=1 // pred_fallthru
      _
    // Predicated region
    $region30: #{tpu_custom_call.1} parent=1 // pred_check
      _
    $region31: #{tpu_custom_call.1} parent=1 // pred_check_branch
      %60 = sbr.rel (0) target = $region33
    $region32: #{tpu_custom_call.1} parent=1 // pred_region
      %61 = dma.done [#allocation8], 2048
    $region33: #{tpu_custom_call.1} parent=1 // pred_fallthru
      _
    %p62 = scmp.eq.s32.totalorder 0, 0
    // Predicated region
    $region34: #{tpu_custom_call.1} parent=1 // pred_check
      %p63 = pneg %p62
    $region35: #{tpu_custom_call.1} parent=1 // pred_check_branch
      %65 = sbr.rel (%p63) target = $region37
    $region36: #{tpu_custom_call.1} parent=1 // pred_region
      %66 = vst [vmem:[#allocation10] sm:$0xff] 0.0
    $region37: #{tpu_custom_call.1} parent=1 // pred_fallthru
      _
    %s67 = sld [smem:[#allocation3]]
    %v68 = vlaneseq
    %v69 = vshrl.u32 %v68, 7
    %v70 = vadd.s32 %v69, 8
    %v71 = vadd.s32 %v69, 16
    %v72 = vadd.s32 %v69, 24
    %v73 = vadd.s32 %v69, 32
    %v74 = vadd.s32 %v69, 40
    %v75 = vadd.s32 %v69, 48
    %v76 = vadd.s32 %v69, 56
    %v77 = vadd.s32 %v69, 64
    %v78 = vadd.s32 %v69, 72
    %v79 = vadd.s32 %v69, 80
    %v80 = vadd.s32 %v69, 88
    %v81 = vadd.s32 %v69, 96
    %v82 = vadd.s32 %v69, 104
    %v83 = vadd.s32 %v69, 112
    %v84 = vadd.s32 %v69, 120
    %s85 = smul.u32 0, 128
    %v86 = vstv %s85
    %v87 = vadd.s32 %v69, %v86
    %v88 = vadd.s32 %v70, %v86
    %v89 = vadd.s32 %v71, %v86
    %v90 = vadd.s32 %v72, %v86
    %v91 = vadd.s32 %v73, %v86
    %v92 = vadd.s32 %v74, %v86
    %v93 = vadd.s32 %v75, %v86
    %v94 = vadd.s32 %v76, %v86
    %v95 = vadd.s32 %v77, %v86
    %v96 = vadd.s32 %v78, %v86
    %v97 = vadd.s32 %v79, %v86
    %v98 = vadd.s32 %v80, %v86
    %v99 = vadd.s32 %v81, %v86
    %v100 = vadd.s32 %v82, %v86
    %v101 = vadd.s32 %v83, %v86
    %v102 = vadd.s32 %v84, %v86
    %v103 = vlaneseq
    %v104 = vand.u32 %v103, 127
    %s105 = smul.u32 0, 128
    %v106 = vstv %s105
    %v107 = vadd.s32 %v104, %v106
    %v108 = vmul.u32 %v87, 2654435761
    %v109 = vmul.u32 %v88, 2654435761
    %v110 = vmul.u32 %v89, 2654435761
    %v111 = vmul.u32 %v90, 2654435761
    %v112 = vmul.u32 %v91, 2654435761
    %v113 = vmul.u32 %v92, 2654435761
    %v114 = vmul.u32 %v93, 2654435761
    %v115 = vmul.u32 %v94, 2654435761
    %v116 = vmul.u32 %v95, 2654435761
    %v117 = vmul.u32 %v96, 2654435761
    %v118 = vmul.u32 %v97, 2654435761
    %v119 = vmul.u32 %v98, 2654435761
    %v120 = vmul.u32 %v99, 2654435761
    %v121 = vmul.u32 %v100, 2654435761
    %v122 = vmul.u32 %v101, 2654435761
    %v123 = vmul.u32 %v102, 2654435761
    %v124 = vstv %s67
    %v125 = vadd.s32 %v124, %v108
    %v126 = vadd.s32 %v124, %v109
    %v127 = vadd.s32 %v124, %v110
    %v128 = vadd.s32 %v124, %v111
    %v129 = vadd.s32 %v124, %v112
    %v130 = vadd.s32 %v124, %v113
    %v131 = vadd.s32 %v124, %v114
    %v132 = vadd.s32 %v124, %v115
    %v133 = vadd.s32 %v124, %v116
    %v134 = vadd.s32 %v124, %v117
    %v135 = vadd.s32 %v124, %v118
    %v136 = vadd.s32 %v124, %v119
    %v137 = vadd.s32 %v124, %v120
    %v138 = vadd.s32 %v124, %v121
    %v139 = vadd.s32 %v124, %v122
    %v140 = vadd.s32 %v124, %v123
    %v141 = vmul.u32 %v107, 2246822519
    %v142 = vadd.s32 %v125, %v141
    %v143 = vadd.s32 %v126, %v141
    %v144 = vadd.s32 %v127, %v141
    %v145 = vadd.s32 %v128, %v141
    %v146 = vadd.s32 %v129, %v141
    %v147 = vadd.s32 %v130, %v141
    %v148 = vadd.s32 %v131, %v141
    %v149 = vadd.s32 %v132, %v141
    %v150 = vadd.s32 %v133, %v141
    %v151 = vadd.s32 %v134, %v141
    %v152 = vadd.s32 %v135, %v141
    %v153 = vadd.s32 %v136, %v141
    %v154 = vadd.s32 %v137, %v141
    %v155 = vadd.s32 %v138, %v141
    %v156 = vadd.s32 %v139, %v141
    %v157 = vadd.s32 %v140, %v141
    %v158 = vshra.s32 %v142, 16
    %v159 = vshra.s32 %v143, 16
    %v160 = vshra.s32 %v144, 16
    %v161 = vshra.s32 %v145, 16
    %v162 = vshra.s32 %v146, 16
    %v163 = vshra.s32 %v147, 16
    %v164 = vshra.s32 %v148, 16
    %v165 = vshra.s32 %v149, 16
    %v166 = vshra.s32 %v150, 16
    %v167 = vshra.s32 %v151, 16
    %v168 = vshra.s32 %v152, 16
    %v169 = vshra.s32 %v153, 16
    %v170 = vshra.s32 %v154, 16
    %v171 = vshra.s32 %v155, 16
    %v172 = vshra.s32 %v156, 16
    %v173 = vshra.s32 %v157, 16
    %v174 = vand.u32 %v158, 65535
    %v175 = vand.u32 %v159, 65535
    %v176 = vand.u32 %v160, 65535
    %v177 = vand.u32 %v161, 65535
    %v178 = vand.u32 %v162, 65535
    %v179 = vand.u32 %v163, 65535
    %v180 = vand.u32 %v164, 65535
    %v181 = vand.u32 %v165, 65535
    %v182 = vand.u32 %v166, 65535
    %v183 = vand.u32 %v167, 65535
    %v184 = vand.u32 %v168, 65535
    %v185 = vand.u32 %v169, 65535
    %v186 = vand.u32 %v170, 65535
    %v187 = vand.u32 %v171, 65535
    %v188 = vand.u32 %v172, 65535
    %v189 = vand.u32 %v173, 65535
    %v190 = vxor.u32 %v142, %v174
    %v191 = vxor.u32 %v143, %v175
    %v192 = vxor.u32 %v144, %v176
    %v193 = vxor.u32 %v145, %v177
    %v194 = vxor.u32 %v146, %v178
    %v195 = vxor.u32 %v147, %v179
    %v196 = vxor.u32 %v148, %v180
    %v197 = vxor.u32 %v149, %v181
    %v198 = vxor.u32 %v150, %v182
    %v199 = vxor.u32 %v151, %v183
    %v200 = vxor.u32 %v152, %v184
    %v201 = vxor.u32 %v153, %v185
    %v202 = vxor.u32 %v154, %v186
    %v203 = vxor.u32 %v155, %v187
    %v204 = vxor.u32 %v156, %v188
    %v205 = vxor.u32 %v157, %v189
    %v206 = vmul.u32 %v190, 2146121005
    %v207 = vmul.u32 %v191, 2146121005
    %v208 = vmul.u32 %v192, 2146121005
    %v209 = vmul.u32 %v193, 2146121005
    %v210 = vmul.u32 %v194, 2146121005
    %v211 = vmul.u32 %v195, 2146121005
    %v212 = vmul.u32 %v196, 2146121005
    %v213 = vmul.u32 %v197, 2146121005
    %v214 = vmul.u32 %v198, 2146121005
    %v215 = vmul.u32 %v199, 2146121005
    %v216 = vmul.u32 %v200, 2146121005
    %v217 = vmul.u32 %v201, 2146121005
    %v218 = vmul.u32 %v202, 2146121005
    %v219 = vmul.u32 %v203, 2146121005
    %v220 = vmul.u32 %v204, 2146121005
    %v221 = vmul.u32 %v205, 2146121005
    %v222 = vshra.s32 %v206, 15
    %v223 = vshra.s32 %v207, 15
    %v224 = vshra.s32 %v208, 15
    %v225 = vshra.s32 %v209, 15
    %v226 = vshra.s32 %v210, 15
    %v227 = vshra.s32 %v211, 15
    %v228 = vshra.s32 %v212, 15
    %v229 = vshra.s32 %v213, 15
    %v230 = vshra.s32 %v214, 15
    %v231 = vshra.s32 %v215, 15
    %v232 = vshra.s32 %v216, 15
    %v233 = vshra.s32 %v217, 15
    %v234 = vshra.s32 %v218, 15
    %v235 = vshra.s32 %v219, 15
    %v236 = vshra.s32 %v220, 15
    %v237 = vshra.s32 %v221, 15
    %v238 = vand.u32 %v222, 131071
    %v239 = vand.u32 %v223, 131071
    %v240 = vand.u32 %v224, 131071
    %v241 = vand.u32 %v225, 131071
    %v242 = vand.u32 %v226, 131071
    %v243 = vand.u32 %v227, 131071
    %v244 = vand.u32 %v228, 131071
    %v245 = vand.u32 %v229, 131071
    %v246 = vand.u32 %v230, 131071
    %v247 = vand.u32 %v231, 131071
    %v248 = vand.u32 %v232, 131071
    %v249 = vand.u32 %v233, 131071
    %v250 = vand.u32 %v234, 131071
    %v251 = vand.u32 %v235, 131071
    %v252 = vand.u32 %v236, 131071
    %v253 = vand.u32 %v237, 131071
    %v254 = vxor.u32 %v206, %v238
    %v255 = vxor.u32 %v207, %v239
    %v256 = vxor.u32 %v208, %v240
    %v257 = vxor.u32 %v209, %v241
    %v258 = vxor.u32 %v210, %v242
    %v259 = vxor.u32 %v211, %v243
    %v260 = vxor.u32 %v212, %v244
    %v261 = vxor.u32 %v213, %v245
    %v262 = vxor.u32 %v214, %v246
    %v263 = vxor.u32 %v215, %v247
    %v264 = vxor.u32 %v216, %v248
    %v265 = vxor.u32 %v217, %v249
    %v266 = vxor.u32 %v218, %v250
    %v267 = vxor.u32 %v219, %v251
    %v268 = vxor.u32 %v220, %v252
    %v269 = vxor.u32 %v221, %v253
    %v270 = vmul.u32 %v254, 2221713035
    %v271 = vmul.u32 %v255, 2221713035
    %v272 = vmul.u32 %v256, 2221713035
    %v273 = vmul.u32 %v257, 2221713035
    %v274 = vmul.u32 %v258, 2221713035
    %v275 = vmul.u32 %v259, 2221713035
    %v276 = vmul.u32 %v260, 2221713035
    %v277 = vmul.u32 %v261, 2221713035
    %v278 = vmul.u32 %v262, 2221713035
    %v279 = vmul.u32 %v263, 2221713035
    %v280 = vmul.u32 %v264, 2221713035
    %v281 = vmul.u32 %v265, 2221713035
    %v282 = vmul.u32 %v266, 2221713035
    %v283 = vmul.u32 %v267, 2221713035
    %v284 = vmul.u32 %v268, 2221713035
    %v285 = vmul.u32 %v269, 2221713035
    %v286 = vshra.s32 %v270, 16
    %v287 = vshra.s32 %v271, 16
    %v288 = vshra.s32 %v272, 16
    %v289 = vshra.s32 %v273, 16
    %v290 = vshra.s32 %v274, 16
    %v291 = vshra.s32 %v275, 16
    %v292 = vshra.s32 %v276, 16
    %v293 = vshra.s32 %v277, 16
    %v294 = vshra.s32 %v278, 16
    %v295 = vshra.s32 %v279, 16
    %v296 = vshra.s32 %v280, 16
    %v297 = vshra.s32 %v281, 16
    %v298 = vshra.s32 %v282, 16
    %v299 = vshra.s32 %v283, 16
    %v300 = vshra.s32 %v284, 16
    %v301 = vshra.s32 %v285, 16
    %v302 = vand.u32 %v286, 65535
    %v303 = vand.u32 %v287, 65535
    %v304 = vand.u32 %v288, 65535
    %v305 = vand.u32 %v289, 65535
    %v306 = vand.u32 %v290, 65535
    %v307 = vand.u32 %v291, 65535
    %v308 = vand.u32 %v292, 65535
    %v309 = vand.u32 %v293, 65535
    %v310 = vand.u32 %v294, 65535
    %v311 = vand.u32 %v295, 65535
    %v312 = vand.u32 %v296, 65535
    %v313 = vand.u32 %v297, 65535
    %v314 = vand.u32 %v298, 65535
    %v315 = vand.u32 %v299, 65535
    %v316 = vand.u32 %v300, 65535
    %v317 = vand.u32 %v301, 65535
    %v318 = vxor.u32 %v270, %v302
    %v319 = vxor.u32 %v271, %v303
    %v320 = vxor.u32 %v272, %v304
    %v321 = vxor.u32 %v273, %v305
    %v322 = vxor.u32 %v274, %v306
    %v323 = vxor.u32 %v275, %v307
    %v324 = vxor.u32 %v276, %v308
    %v325 = vxor.u32 %v277, %v309
    %v326 = vxor.u32 %v278, %v310
    %v327 = vxor.u32 %v279, %v311
    %v328 = vxor.u32 %v280, %v312
    %v329 = vxor.u32 %v281, %v313
    %v330 = vxor.u32 %v282, %v314
    %v331 = vxor.u32 %v283, %v315
    %v332 = vxor.u32 %v284, %v316
    %v333 = vxor.u32 %v285, %v317
    %v334 = vshra.s32 %v318, 8
    %v335 = vshra.s32 %v319, 8
    %v336 = vshra.s32 %v320, 8
    %v337 = vshra.s32 %v321, 8
    %v338 = vshra.s32 %v322, 8
    %v339 = vshra.s32 %v323, 8
    %v340 = vshra.s32 %v324, 8
    %v341 = vshra.s32 %v325, 8
    %v342 = vshra.s32 %v326, 8
    %v343 = vshra.s32 %v327, 8
    %v344 = vshra.s32 %v328, 8
    %v345 = vshra.s32 %v329, 8
    %v346 = vshra.s32 %v330, 8
    %v347 = vshra.s32 %v331, 8
    %v348 = vshra.s32 %v332, 8
    %v349 = vshra.s32 %v333, 8
    %v350 = vand.u32 %v334, 16777215
    %v351 = vand.u32 %v335, 16777215
    %v352 = vand.u32 %v336, 16777215
    %v353 = vand.u32 %v337, 16777215
    %v354 = vand.u32 %v338, 16777215
    %v355 = vand.u32 %v339, 16777215
    %v356 = vand.u32 %v340, 16777215
    %v357 = vand.u32 %v341, 16777215
    %v358 = vand.u32 %v342, 16777215
    %v359 = vand.u32 %v343, 16777215
    %v360 = vand.u32 %v344, 16777215
    %v361 = vand.u32 %v345, 16777215
    %v362 = vand.u32 %v346, 16777215
    %v363 = vand.u32 %v347, 16777215
    %v364 = vand.u32 %v348, 16777215
    %v365 = vand.u32 %v349, 16777215
    %v366 = vcvt.s32.f32 %v350
    %v367 = vcvt.s32.f32 %v351
    %v368 = vcvt.s32.f32 %v352
    %v369 = vcvt.s32.f32 %v353
    %v370 = vcvt.s32.f32 %v354
    %v371 = vcvt.s32.f32 %v355
    %v372 = vcvt.s32.f32 %v356
    %v373 = vcvt.s32.f32 %v357
    %v374 = vcvt.s32.f32 %v358
    %v375 = vcvt.s32.f32 %v359
    %v376 = vcvt.s32.f32 %v360
    %v377 = vcvt.s32.f32 %v361
    %v378 = vcvt.s32.f32 %v362
    %v379 = vcvt.s32.f32 %v363
    %v380 = vcvt.s32.f32 %v364
    %v381 = vcvt.s32.f32 %v365
    %v382 = vmul.f32 %v366, 5.9604645e-08
    %v383 = vmul.f32 %v367, 5.9604645e-08
    %v384 = vmul.f32 %v368, 5.9604645e-08
    %v385 = vmul.f32 %v369, 5.9604645e-08
    %v386 = vmul.f32 %v370, 5.9604645e-08
    %v387 = vmul.f32 %v371, 5.9604645e-08
    %v388 = vmul.f32 %v372, 5.9604645e-08
    %v389 = vmul.f32 %v373, 5.9604645e-08
    %v390 = vmul.f32 %v374, 5.9604645e-08
    %v391 = vmul.f32 %v375, 5.9604645e-08
    %v392 = vmul.f32 %v376, 5.9604645e-08
    %v393 = vmul.f32 %v377, 5.9604645e-08
    %v394 = vmul.f32 %v378, 5.9604645e-08
    %v395 = vmul.f32 %v379, 5.9604645e-08
    %v396 = vmul.f32 %v380, 5.9604645e-08
    %v397 = vmul.f32 %v381, 5.9604645e-08
    %v398 = vld [vmem:[#allocation7] sm:$0xff]
    %v399 = vld [vmem:[#allocation7 + $0x8] sm:$0xff]
    %v400 = vld [vmem:[#allocation7 + $0x10] sm:$0xff]
    %v401 = vld [vmem:[#allocation7 + $0x18] sm:$0xff]
    %v402 = vld [vmem:[#allocation7 + $0x20] sm:$0xff]
    %v403 = vld [vmem:[#allocation7 + $0x28] sm:$0xff]
    %v404 = vld [vmem:[#allocation7 + $0x30] sm:$0xff]
    %v405 = vld [vmem:[#allocation7 + $0x38] sm:$0xff]
    %v406 = vld [vmem:[#allocation7 + $0x40] sm:$0xff]
    %v407 = vld [vmem:[#allocation7 + $0x48] sm:$0xff]
    %v408 = vld [vmem:[#allocation7 + $0x50] sm:$0xff]
    %v409 = vld [vmem:[#allocation7 + $0x58] sm:$0xff]
    %v410 = vld [vmem:[#allocation7 + $0x60] sm:$0xff]
    %v411 = vld [vmem:[#allocation7 + $0x68] sm:$0xff]
    %v412 = vld [vmem:[#allocation7 + $0x70] sm:$0xff]
    %v413 = vld [vmem:[#allocation7 + $0x78] sm:$0xff]
    %v414 = vld [vmem:[#allocation9] sm:$0xff]
    %v415 = vld [vmem:[#allocation9 + $0x8] sm:$0xff]
    %v416 = vld [vmem:[#allocation9 + $0x10] sm:$0xff]
    %v417 = vld [vmem:[#allocation9 + $0x18] sm:$0xff]
    %v418 = vld [vmem:[#allocation9 + $0x20] sm:$0xff]
    %v419 = vld [vmem:[#allocation9 + $0x28] sm:$0xff]
    %v420 = vld [vmem:[#allocation9 + $0x30] sm:$0xff]
    %v421 = vld [vmem:[#allocation9 + $0x38] sm:$0xff]
    %v422 = vld [vmem:[#allocation9 + $0x40] sm:$0xff]
    %v423 = vld [vmem:[#allocation9 + $0x48] sm:$0xff]
    %v424 = vld [vmem:[#allocation9 + $0x50] sm:$0xff]
    %v425 = vld [vmem:[#allocation9 + $0x58] sm:$0xff]
    %v426 = vld [vmem:[#allocation9 + $0x60] sm:$0xff]
    %v427 = vld [vmem:[#allocation9 + $0x68] sm:$0xff]
    %v428 = vld [vmem:[#allocation9 + $0x70] sm:$0xff]
    %v429 = vld [vmem:[#allocation9 + $0x78] sm:$0xff]
    %v430 = vmul.f32 %v414, %v382
    %v431 = vmul.f32 %v415, %v383
    %v432 = vmul.f32 %v416, %v384
    %v433 = vmul.f32 %v417, %v385
    %v434 = vmul.f32 %v418, %v386
    %v435 = vmul.f32 %v419, %v387
    %v436 = vmul.f32 %v420, %v388
    %v437 = vmul.f32 %v421, %v389
    %v438 = vmul.f32 %v422, %v390
    %v439 = vmul.f32 %v423, %v391
    %v440 = vmul.f32 %v424, %v392
    %v441 = vmul.f32 %v425, %v393
    %v442 = vmul.f32 %v426, %v394
    %v443 = vmul.f32 %v427, %v395
    %v444 = vmul.f32 %v428, %v396
    %v445 = vmul.f32 %v429, %v397
    %v446 = vadd.f32 %v398, %v430
    %v447 = vadd.f32 %v399, %v431
    %v448 = vadd.f32 %v400, %v432
    %v449 = vadd.f32 %v401, %v433
    %v450 = vadd.f32 %v402, %v434
    %v451 = vadd.f32 %v403, %v435
    %v452 = vadd.f32 %v404, %v436
    %v453 = vadd.f32 %v405, %v437
    %v454 = vadd.f32 %v406, %v438
    %v455 = vadd.f32 %v407, %v439
    %v456 = vadd.f32 %v408, %v440
    %v457 = vadd.f32 %v409, %v441
    %v458 = vadd.f32 %v410, %v442
    %v459 = vadd.f32 %v411, %v443
    %v460 = vadd.f32 %v412, %v444
    %v461 = vadd.f32 %v413, %v445
    %v462 = vld [vmem:[#allocation4] sm:$0xff]
    %v463 = vld [vmem:[#allocation10] sm:$0xff]
    %464 = vmatprep.subr.mxu0 0.0
    %465 = vmatpush1.xpose.msra.mxu0 %v461
    %466 = vmatprep.subr.mxu0 0.0
    %467 = vmatpush1.xpose.msra.mxu0 %v460
    %468 = vmatprep.subr.mxu0 0.0
    %469 = vmatpush1.xpose.msra.mxu0 %v459
    %470 = vmatprep.subr.mxu0 0.0
    %471 = vmatpush1.xpose.msra.mxu0 %v458
    %472 = vmatprep.subr.mxu0 0.0
    %473 = vmatpush1.xpose.msra.mxu0 %v457
    %474 = vmatprep.subr.mxu0 0.0
    %475 = vmatpush1.xpose.msra.mxu0 %v456
    %476 = vmatprep.subr.mxu0 0.0
    %477 = vmatpush1.xpose.msra.mxu0 %v455
    %478 = vmatprep.subr.mxu0 0.0
    %479 = vmatpush1.xpose.msra.mxu0 %v454
    %480 = vmatprep.subr.mxu0 0.0
    %481 = vmatpush1.xpose.msra.mxu0 %v453
    %482 = vmatprep.subr.mxu0 0.0
    %483 = vmatpush1.xpose.msra.mxu0 %v452
    %484 = vmatprep.subr.mxu0 0.0
    %485 = vmatpush1.xpose.msra.mxu0 %v451
    %486 = vmatprep.subr.mxu0 0.0
    %487 = vmatpush1.xpose.msra.mxu0 %v450
    %488 = vmatprep.subr.mxu0 0.0
    %489 = vmatpush1.xpose.msra.mxu0 %v449
    %490 = vmatprep.subr.mxu0 0.0
    %491 = vmatpush1.xpose.msra.mxu0 %v448
    %492 = vmatprep.subr.mxu0 0.0
    %493 = vmatpush1.xpose.msra.mxu0 %v447
    %494 = vmatprep.subr.mxu0 0.0
    %495 = vmatpush1.xpose.msra.mxu0 %v446
    %496 = vmatprep.subr.mxu0 0.0
    %497 = vmatpush2.xpose.msra.mxu0 0.0
    %498 = vmatprep.subr.mxu0 0.0
    %499 = vmatpush2.xpose.msra.mxu0 0.0
    %500 = vmatprep.subr.mxu0 0.0
    %501 = vmatpush2.xpose.msra.mxu0 0.0
    %502 = vmatprep.subr.mxu0 0.0
    %503 = vmatpush2.xpose.msra.mxu0 0.0
    %504 = vmatprep.subr.mxu0 0.0
    %505 = vmatpush2.xpose.msra.mxu0 0.0
    %506 = vmatprep.subr.mxu0 0.0
    %507 = vmatpush2.xpose.msra.mxu0 0.0
    %508 = vmatprep.subr.mxu0 0.0
    %509 = vmatpush2.xpose.msra.mxu0 0.0
    %510 = vmatprep.subr.mxu0 0.0
    %511 = vmatpush2.xpose.msra.mxu0 0.0
    %512 = vmatprep.subr.mxu0 0.0
    %513 = vmatpush2.xpose.msra.mxu0 0.0
    %514 = vmatprep.subr.mxu0 0.0
    %515 = vmatpush2.xpose.msra.mxu0 0.0
    %516 = vmatprep.subr.mxu0 0.0
    %517 = vmatpush2.xpose.msra.mxu0 0.0
    %518 = vmatprep.subr.mxu0 0.0
    %519 = vmatpush2.xpose.msra.mxu0 0.0
    %520 = vmatprep.subr.mxu0 0.0
    %521 = vmatpush2.xpose.msra.mxu0 0.0
    %522 = vmatprep.subr.mxu0 0.0
    %523 = vmatpush2.xpose.msra.mxu0 0.0
    %524 = vmatprep.subr.mxu0 0.0
    %525 = vmatpush2.xpose.msra.mxu0 0.0
    %526 = vmatprep.subr.mxu0 0.0
    %527 = vmatpush2.xpose.msra.mxu0 0.0
    %528 = vmatprep.mubr.f32.mxu0 0.0
    %529 = vmatmul.mubr.f32.gmra.mxu0 %v462
    %v530 = vpop.f32.mrf.mxu0
    %v531 = vadd.f32 0.0, %v530
    %v532 = vpop.f32.mrf.mxu0
    %533 = vdwg.mxu0
    %v534 = vadd.f32 %v463, %v531
    %535 = vst [vmem:[#allocation10] sm:$0xff] %v534
    // Predicated region
    $region38: #{tpu_custom_call.1} parent=1 // pred_check
      %p536 = pneg %p62
    $region39: #{tpu_custom_call.1} parent=1 // pred_check_branch
      %538 = sbr.rel (%p536) target = $region41
    $region40: #{tpu_custom_call.1} parent=1 // pred_region
      %v539 = vadd.s32 %v104, %v86
      %s540 = sxor.u32 %s67, 1540483477
      %v541 = vmul.u32 %v539, 2654435761
      %v542 = vstv %s540
      %v543 = vadd.s32 %v542, %v541
      %v544 = vshra.s32 %v543, 16
      %v545 = vand.u32 %v544, 65535
      %v546 = vxor.u32 %v543, %v545
      %v547 = vmul.u32 %v546, 2146121005
      %v548 = vshra.s32 %v547, 15
      %v549 = vand.u32 %v548, 131071
      %v550 = vxor.u32 %v547, %v549
      %v551 = vmul.u32 %v550, 2221713035
      %v552 = vshra.s32 %v551, 16
      %v553 = vand.u32 %v552, 65535
      %v554 = vxor.u32 %v551, %v553
      %v555 = vshra.s32 %v554, 8
      %v556 = vand.u32 %v555, 16777215
      %v557 = vcvt.s32.f32 %v556
      %v558 = vmul.f32 %v557, 5.9604645e-08
      %v559 = vld [vmem:[#allocation10] sm:$0xff]
      %v560 = vld [vmem:[%s4] sm:$0x1]
      %v561 = vld [vmem:[%s5] sm:$0x1]
      %v562 = vmul.f32 %v561, %v558
      %v563 = vadd.f32 %v560, %v562
      %v565 = vlaneseq
      %v566 = vshrl.u32 %v565, 7
      %v567 = vsub.s32 0, %v566
      %v568 = vrot.slane %v563, %v567
      %v570 = vadd.f32 %v559, %v568
      %571 = vst [vmem:[#allocation10] sm:$0xff] %v570
    $region41: #{tpu_custom_call.1} parent=1 // pred_fallthru
      _
    // Predicated region
    $region42: #{tpu_custom_call.1} parent=1 // pred_check
      _
    $region43: #{tpu_custom_call.1} parent=1 // pred_check_branch
      %573 = sbr.rel (0) target = $region45
    $region44: #{tpu_custom_call.1} parent=1 // pred_region
      %s575 = ssub.s32 128, 128
      %576 = vsyncadd [#allocation6], %s575
      %s578 = sshll.u32 [#allocation10], 4
      %s579 = int_to_ptr.vmem [resolvable:$true] %s578
      %581 = dma.vmem_to_hbm [thread:$0]  %s579, 128, %s6, [#allocation6]
    $region45: #{tpu_custom_call.1} parent=1 // pred_fallthru
      _
    // Predicated region
    $region46: #{tpu_custom_call.1} parent=1 // pred_check
      _
    $region47: #{tpu_custom_call.1} parent=1 // pred_check_branch
      %583 = sbr.rel (0) target = $region49
    $region48: #{tpu_custom_call.1} parent=1 // pred_region
      %584 = dma.done [#allocation6], 128
    $region49: #{tpu_custom_call.1} parent=1 // pred_fallthru
      _
    %585 = vsyncpa [#allocation5], 1
    %586 = vsyncpa [#allocation8], 1
    %587 = vsyncpa [#allocation6], 1

</llo_original>
